<compile_context>
chip_gen: v5e
topology: v5e:2x2
jax: 0.10.0
libtpu: 0.0.40
codegen_flags: <defaults>
</compile_context>

<pallas_src>
import math
from functools import partial

import jax
import jax.numpy as jnp
from jax.experimental import pallas as pl
from jax.experimental.pallas import tpu as pltpu

D_MODEL = 32
NHEAD = 4
DIM_FF = 64
EPS = 1e-5          # PyTorch LayerNorm default eps
SEG = 128           # lane-aligned segment width inside the packed weight slab


def _layernorm(x, w, b):
    mu = jnp.mean(x, axis=-1, keepdims=True)
    var = jnp.mean((x - mu) ** 2, axis=-1, keepdims=True)
    return (x - mu) * jax.lax.rsqrt(var + EPS) * w + b


def gated_txl_kernel(x_ref, wdd_ref, w2g_ref, bias_ref, out_ref, *,
                     nhead, batch, seq):
    Nt, D = x_ref.shape            # tokens in this block (= batch*seq), d_model
    F = w2g_ref.shape[0]
    dh = D // nhead
    scale = 1.0 / math.sqrt(dh)
    cdt = wdd_ref.dtype            # MXU operand dtype (bf16 or f32)

    x = x_ref[...]                 # (Nt, D) f32 residual stream

    # ---- bias / LayerNorm parameters: one 128-lane row per parameter -------
    def brow(i, w=D):
        return bias_ref[i:i + 1, 0:w]          # (1, w) f32, lane offset 0

    ln1_w, ln1_b = brow(0), brow(1)
    bqkv = brow(2, 3 * D)
    c1 = brow(3)                                # bo @ G1b + bg1   (folded)
    ln2_w, ln2_b = brow(4), brow(5)
    b1 = brow(6, F)
    c2 = brow(7)                                # b2 @ G2b + bg2   (folded)
    ln3_w, ln3_b = brow(8), brow(9)

    # ---- block 1: pre-LN multi-head self-attention + gate1 + residual ------
    xn = _layernorm(x, ln1_w, ln1_b)
    wqkv = wdd_ref[:, 0:3 * D]                  # fused Q|K|V     (D, 3D)
    qkv = jnp.dot(xn.astype(cdt), wqkv,
                  preferred_element_type=jnp.float32) + bqkv        # (Nt, 3D) f32

    # Heads moved onto the leading batch axis once -> (batch*nhead, seq, dh);
    # everything below stays 3-D with a single leading batch dim.
    def split_heads(off):
        cols = [qkv[:, off + h * dh: off + (h + 1) * dh].reshape(batch, seq, dh)
                for h in range(nhead)]
        return jnp.concatenate(cols, axis=0).astype(cdt)            # (B*H, S, dh)

    q = split_heads(0)
    k = split_heads(D)
    v = split_heads(2 * D)

    s = jnp.einsum('bqd,bkd->bqk', q, k,
                   preferred_element_type=jnp.float32) * scale      # (B*H, S, S)
    s = s - jnp.max(s, axis=-1, keepdims=True)
    p = jnp.exp(s)
    p = p * pl.reciprocal(jnp.sum(p, axis=-1, keepdims=True), approx=True)
    o = jnp.einsum('bqk,bkd->bqd', p.astype(cdt), v,
                   preferred_element_type=jnp.float32)               # (B*H, S, dh)

    # Head concat -> (Nt, D); single output-projection matmul (folded with G1b)
    o = jnp.concatenate(
        [o[h * batch:(h + 1) * batch].reshape(Nt, dh) for h in range(nhead)],
        axis=-1)

    wo_g1 = wdd_ref[:, SEG:SEG + D]             # Wo @ G1b   (D, D)
    g1a = wdd_ref[:, 2 * SEG:2 * SEG + D]       # G1a        (D, D)
    gate1 = (jnp.dot(x.astype(cdt), g1a, preferred_element_type=jnp.float32)
             + jnp.dot(o.astype(cdt), wo_g1, preferred_element_type=jnp.float32)
             + c1)
    x = x + gate1                               # dropout1 == identity (f32 residual)

    # ---- block 2: pre-LN feed-forward + gate2 + residual -------------------
    xn2 = _layernorm(x, ln2_w, ln2_b)
    w1 = wdd_ref[:, 3 * SEG:3 * SEG + F]        # W1         (D, F)
    hdn = jnp.maximum(
        jnp.dot(xn2.astype(cdt), w1, preferred_element_type=jnp.float32) + b1,
        0.0)

    g2a = wdd_ref[:, 4 * SEG:4 * SEG + D]       # G2a        (D, D)
    w2g = w2g_ref[...]                          # W2 @ G2b   (F, D)
    gate2 = (jnp.dot(x.astype(cdt), g2a, preferred_element_type=jnp.float32)
             + jnp.dot(hdn.astype(cdt), w2g, preferred_element_type=jnp.float32)
             + c2)
    x = x + gate2                               # dropout2 == identity

    out_ref[...] = _layernorm(x, ln3_w, ln3_b)
    # TODO(synk): at these toy shapes the (Nt, 32) store is a masked vst; for
    # deployment shapes with B*S >= 128 a token-on-lanes layout would be denser.


# --------------------------- parameter handling -----------------------------
def init_params(key, d_model=D_MODEL, dim_ff=DIM_FF):
    """Deterministic synthetic weights (stored pre-transposed: x @ W)."""
    D, F = d_model, dim_ff
    ks = jax.random.split(key, 16)

    def w(k, shape, s=0.05):
        return jax.random.normal(k, shape, jnp.float32) * s

    return {
        "ln1_w": jnp.ones((1, D), jnp.float32), "ln1_b": jnp.zeros((1, D), jnp.float32),
        "wq": w(ks[0], (D, D)), "wk": w(ks[1], (D, D)), "wv": w(ks[2], (D, D)),
        "bq": w(ks[3], (1, D)), "bk": w(ks[4], (1, D)), "bv": w(ks[5], (1, D)),
        "wo": w(ks[6], (D, D)), "bo": w(ks[7], (1, D)),
        "g1a": w(ks[8], (D, D)), "g1b": w(ks[9], (D, D)),
        "bg1": jnp.zeros((1, D), jnp.float32),
        "ln2_w": jnp.ones((1, D), jnp.float32), "ln2_b": jnp.zeros((1, D), jnp.float32),
        "w1": w(ks[10], (D, F)), "b1": jnp.zeros((1, F), jnp.float32),
        "w2": w(ks[11], (F, D)), "b2": jnp.zeros((1, D), jnp.float32),
        "g2a": w(ks[12], (D, D)), "g2b": w(ks[13], (D, D)),
        "bg2": jnp.zeros((1, D), jnp.float32),
        "ln3_w": jnp.ones((1, D), jnp.float32), "ln3_b": jnp.zeros((1, D), jnp.float32),
    }


def pack_params(p, *, use_bf16=True):
    """Fold the gate projections and pack into 128-lane-aligned slabs.

    Folds (done once, in f32, in the wrapper -> zero runtime cost):
        Wo @ G1b,  bo @ G1b + bg1,  W2 @ G2b,  b2 @ G2b + bg2
    Slabs:
        wdd  (D, 5*128)  segments: [Wqkv | Wo@G1b | G1a | W1 | G2a]  (bf16/f32)
        w2g  (F, D)      W2 @ G2b                                    (bf16/f32)
        bias (10, 128)   one row per bias/LN vector                  (f32)
    """
    D = p["wq"].shape[0]
    F = p["w1"].shape[1]
    assert 3 * D <= SEG and F <= SEG, "packing assumes 3*d_model<=128 and dim_ff<=128"
    wdt = jnp.bfloat16 if use_bf16 else jnp.float32

    wo_g1 = p["wo"] @ p["g1b"]                       # (D, D)
    w2_g2 = p["w2"] @ p["g2b"]                       # (F, D)
    c1 = p["bo"] @ p["g1b"] + p["bg1"]               # (1, D)
    c2 = p["b2"] @ p["g2b"] + p["bg2"]               # (1, D)

    def pad_seg(w):
        return jnp.pad(w, ((0, 0), (0, SEG - w.shape[1])))

    wqkv = jnp.concatenate([p["wq"], p["wk"], p["wv"]], axis=1)      # (D, 3D)
    wdd = jnp.concatenate(
        [pad_seg(wqkv), pad_seg(wo_g1), pad_seg(p["g1a"]),
         pad_seg(p["w1"]), pad_seg(p["g2a"])], axis=1).astype(wdt)   # (D, 5*128)
    w2g = w2_g2.astype(wdt)                                          # (F, D)

    def row(v):
        return jnp.pad(v, ((0, 0), (0, SEG - v.shape[1])))

    bqkv = jnp.concatenate([p["bq"], p["bk"], p["bv"]], axis=1)      # (1, 3D)
    bias = jnp.concatenate(
        [row(p["ln1_w"]), row(p["ln1_b"]), row(bqkv), row(c1),
         row(p["ln2_w"]), row(p["ln2_b"]), row(p["b1"]), row(c2),
         row(p["ln3_w"]), row(p["ln3_b"])], axis=0)                  # (10, 128) f32
    return wdd, w2g, bias


def gated_transformer_xl_layer(src_sbd, params, *, nhead=NHEAD, use_bf16=True,
                               batch_block=None):
    """src_sbd: (S, B, D) sequence-first, like the PyTorch module.

    batch_block: batches per grid step.  Default keeps a single grid step
    (grid is a serial loop on v5e/v6e; every extra step costs ~0.35us) and only
    splits the batch into 2 "parallel" blocks when each block still holds
    >= 256 tokens, so v7x's second TensorCore gets real work.
    """
    S, B, D = src_sbd.shape
    assert D % nhead == 0, "d_model must be divisible by nhead"
    N = B * S

    if batch_block is None:
        batch_block = B // 2 if (B % 2 == 0 and (B // 2) * S >= 256) else B
    assert B % batch_block == 0
    n_blocks = B // batch_block
    tok_block = batch_block * S

    # (S,B,D) -> (B,S,D) -> (B*S, D): done on HBM by XLA, keeps all residual-
    # stream reshapes out of the kernel.
    x = jnp.transpose(src_sbd, (1, 0, 2)).reshape(N, D)
    wdd, w2g, bias = pack_params(params, use_bf16=use_bf16)

    kernel = partial(gated_txl_kernel, nhead=nhead, batch=batch_block, seq=S)
    out = pl.pallas_call(
        kernel,
        out_shape=jax.ShapeDtypeStruct((N, D), jnp.float32),
        grid=(n_blocks,),
        in_specs=[
            pl.BlockSpec((tok_block, D), lambda i: (i, 0)),
            pl.BlockSpec(wdd.shape, lambda i: (0, 0)),
            pl.BlockSpec(w2g.shape, lambda i: (0, 0)),
            pl.BlockSpec(bias.shape, lambda i: (0, 0)),
        ],
        out_specs=pl.BlockSpec((tok_block, D), lambda i: (i, 0)),
        compiler_params=pltpu.CompilerParams(
            dimension_semantics=("parallel",),
            vmem_limit_bytes=32 * 1024 * 1024),
    )(x, wdd, w2g, bias)
    return jnp.transpose(out.reshape(B, S, D), (1, 0, 2))            # (S, B, D)


# ---------------- pure-JAX reference (unfolded f32 math, for verification) --
def _ref_single(x, p, nhead=NHEAD):
    D = x.shape[-1]
    dh = D // nhead
    scale = 1.0 / math.sqrt(dh)

    def ln(v, w, b):
        mu = v.mean(-1, keepdims=True)
        var = ((v - mu) ** 2).mean(-1, keepdims=True)
        return (v - mu) / jnp.sqrt(var + EPS) * w + b

    xn = ln(x, p["ln1_w"], p["ln1_b"])
    q = xn @ p["wq"] + p["bq"]
    k = xn @ p["wk"] + p["bk"]
    v = xn @ p["wv"] + p["bv"]
    heads = []
    for h in range(nhead):
        qh, kh, vh = (t[:, h * dh:(h + 1) * dh] for t in (q, k, v))
        s = qh @ kh.T * scale
        pw = jax.nn.softmax(s, axis=-1)
        heads.append(pw @ vh)
    attn = jnp.concatenate(heads, axis=-1) @ p["wo"] + p["bo"]
    x = x + (x @ p["g1a"] + attn @ p["g1b"] + p["bg1"])
    xn2 = ln(x, p["ln2_w"], p["ln2_b"])
    ff = jnp.maximum(xn2 @ p["w1"] + p["b1"], 0.0) @ p["w2"] + p["b2"]
    x = x + (x @ p["g2a"] + ff @ p["g2b"] + p["bg2"])
    return ln(x, p["ln3_w"], p["ln3_b"])


def reference_forward(src_sbd, params):
    x = jnp.transpose(src_sbd, (1, 0, 2))            # (B, S, D)
    y = jax.vmap(lambda xb: _ref_single(xb, params))(x)
    return jnp.transpose(y, (1, 0, 2))


if __name__ == "__main__":
    key = jax.random.PRNGKey(0)
    k_params, k_x = jax.random.split(key)
    params = init_params(k_params)

    S, B = 8, 2
    src = jax.random.normal(k_x, (S, B, D_MODEL), jnp.float32)

    ref = reference_forward(src, params)

    # Exact-math path (f32 MXU operands): tight tolerance.
    out_f32 = jax.block_until_ready(
        gated_transformer_xl_layer(src, params, use_bf16=False))
    assert out_f32.shape == (S, B, D_MODEL)
    assert jnp.allclose(out_f32, ref, atol=3e-3, rtol=3e-3), "f32 path mismatch"

    # Optimized path (bf16 MXU operands, f32 accumulate / LN / softmax):
    # looser tolerance covers bf16 quantization of the matmul operands.
    out = jax.block_until_ready(gated_transformer_xl_layer(src, params))
    assert out.shape == (S, B, D_MODEL)
    assert jnp.allclose(out, ref, atol=3e-2, rtol=3e-2), "bf16 path mismatch"

    print("KERNEL_OK")
</pallas_src>

<mosaic_0001>
module attributes {stable_mosaic.version = 11 : i64} {
  func.func @gated_txl_kernel(%arg0: i32, %arg1: memref<16x32xf32, #tpu.memory_space<vmem>>, %arg2: memref<32x640xf32, #tpu.memory_space<vmem>>, %arg3: memref<64x32xf32, #tpu.memory_space<vmem>>, %arg4: memref<10x128xf32, #tpu.memory_space<vmem>>, %arg5: memref<16x32xf32, #tpu.memory_space<vmem>>) attributes {dimension_semantics = [#tpu.dimension_semantics<parallel>], iteration_bounds = array<i64: 1>, scalar_prefetch = 0 : i64, scratch_operands = 0 : i64, tpu.core_type = #tpu.core_type<tc>, window_params = [{transform_indices = @transform_0, window_bounds = array<i64: 16, 32>}, {pipeline_mode = #tpu.pipeline_mode<synchronous>, transform_indices = @transform_1, window_bounds = array<i64: 32, 640>}, {pipeline_mode = #tpu.pipeline_mode<synchronous>, transform_indices = @transform_2, window_bounds = array<i64: 64, 32>}, {pipeline_mode = #tpu.pipeline_mode<synchronous>, transform_indices = @transform_3, window_bounds = array<i64: 10, 128>}, {transform_indices = @transform_4, window_bounds = array<i64: 16, 32>}]} {
    %c0 = arith.constant 0 : index
    %c0_0 = arith.constant 0 : index
    %0 = vector.load %arg1[%c0, %c0_0] : memref<16x32xf32, #tpu.memory_space<vmem>>, vector<16x32xf32>
    %c0_1 = arith.constant 0 : index
    %c0_2 = arith.constant 0 : index
    %1 = vector.load %arg4[%c0_1, %c0_2] : memref<10x128xf32, #tpu.memory_space<vmem>>, vector<1x32xf32>
    %c1 = arith.constant 1 : index
    %c0_3 = arith.constant 0 : index
    %2 = vector.load %arg4[%c1, %c0_3] : memref<10x128xf32, #tpu.memory_space<vmem>>, vector<1x32xf32>
    %c2 = arith.constant 2 : index
    %c0_4 = arith.constant 0 : index
    %3 = vector.load %arg4[%c2, %c0_4] : memref<10x128xf32, #tpu.memory_space<vmem>>, vector<1x96xf32>
    %c3 = arith.constant 3 : index
    %c0_5 = arith.constant 0 : index
    %4 = vector.load %arg4[%c3, %c0_5] : memref<10x128xf32, #tpu.memory_space<vmem>>, vector<1x32xf32>
    %c4 = arith.constant 4 : index
    %c0_6 = arith.constant 0 : index
    %5 = vector.load %arg4[%c4, %c0_6] : memref<10x128xf32, #tpu.memory_space<vmem>>, vector<1x32xf32>
    %c5 = arith.constant 5 : index
    %c0_7 = arith.constant 0 : index
    %6 = vector.load %arg4[%c5, %c0_7] : memref<10x128xf32, #tpu.memory_space<vmem>>, vector<1x32xf32>
    %c6 = arith.constant 6 : index
    %c0_8 = arith.constant 0 : index
    %7 = vector.load %arg4[%c6, %c0_8] : memref<10x128xf32, #tpu.memory_space<vmem>>, vector<1x64xf32>
    %c7 = arith.constant 7 : index
    %c0_9 = arith.constant 0 : index
    %8 = vector.load %arg4[%c7, %c0_9] : memref<10x128xf32, #tpu.memory_space<vmem>>, vector<1x32xf32>
    %c8 = arith.constant 8 : index
    %c0_10 = arith.constant 0 : index
    %9 = vector.load %arg4[%c8, %c0_10] : memref<10x128xf32, #tpu.memory_space<vmem>>, vector<1x32xf32>
    %c9 = arith.constant 9 : index
    %c0_11 = arith.constant 0 : index
    %10 = vector.load %arg4[%c9, %c0_11] : memref<10x128xf32, #tpu.memory_space<vmem>>, vector<1x32xf32>
    %cst = arith.constant dense<0.000000e+00> : vector<16xf32>
    %11 = vector.multi_reduction <add>, %0, %cst [1] : vector<16x32xf32> to vector<16xf32>
    %12 = vector.shape_cast %11 : vector<16xf32> to vector<16x1xf32>
    %cst_12 = arith.constant 3.200000e+01 : f32
    %13 = vector.broadcast %cst_12 : f32 to vector<16x1xf32>
    %14 = arith.divf %12, %13 : vector<16x1xf32>
    %15 = vector.broadcast %14 : vector<16x1xf32> to vector<16x32xf32>
    %16 = arith.subf %0, %15 : vector<16x32xf32>
    %17 = arith.mulf %16, %16 : vector<16x32xf32>
    %cst_13 = arith.constant dense<0.000000e+00> : vector<16xf32>
    %18 = vector.multi_reduction <add>, %17, %cst_13 [1] : vector<16x32xf32> to vector<16xf32>
    %19 = vector.shape_cast %18 : vector<16xf32> to vector<16x1xf32>
    %cst_14 = arith.constant 3.200000e+01 : f32
    %20 = vector.broadcast %cst_14 : f32 to vector<16x1xf32>
    %21 = arith.divf %19, %20 : vector<16x1xf32>
    %22 = vector.broadcast %14 : vector<16x1xf32> to vector<16x32xf32>
    %23 = arith.subf %0, %22 : vector<16x32xf32>
    %cst_15 = arith.constant 9.99999974E-6 : f32
    %24 = vector.broadcast %cst_15 : f32 to vector<16x1xf32>
    %25 = arith.addf %21, %24 : vector<16x1xf32>
    %26 = math.rsqrt %25 : vector<16x1xf32>
    %27 = vector.broadcast %26 : vector<16x1xf32> to vector<16x32xf32>
    %28 = arith.mulf %23, %27 : vector<16x32xf32>
    %29 = vector.broadcast %1 : vector<1x32xf32> to vector<16x32xf32>
    %30 = arith.mulf %28, %29 : vector<16x32xf32>
    %31 = vector.broadcast %2 : vector<1x32xf32> to vector<16x32xf32>
    %32 = arith.addf %30, %31 : vector<16x32xf32>
    %c0_16 = arith.constant 0 : index
    %c0_17 = arith.constant 0 : index
    %33 = vector.load %arg2[%c0_16, %c0_17] : memref<32x640xf32, #tpu.memory_space<vmem>>, vector<32x96xf32>
    %cst_18 = arith.constant dense<0.000000e+00> : vector<16x96xf32>
    %34 = tpu.matmul %32, %33, %cst_18 {dimension_numbers = #tpu.dot_dimension_numbers<[1], [0], [0], [1], [0, 0, 1, 1], [], []>} : vector<16x32xf32>, vector<32x96xf32>, vector<16x96xf32> -> vector<16x96xf32>
    %35 = vector.broadcast %3 : vector<1x96xf32> to vector<16x96xf32>
    %36 = arith.addf %34, %35 : vector<16x96xf32>
    %37 = vector.extract_strided_slice %36 {offsets = [0, 0], sizes = [16, 8], strides = [1, 1]} : vector<16x96xf32> to vector<16x8xf32>
    %38 = vector.shape_cast %37 : vector<16x8xf32> to vector<2x8x8xf32>
    %39 = vector.extract_strided_slice %36 {offsets = [0, 8], sizes = [16, 8], strides = [1, 1]} : vector<16x96xf32> to vector<16x8xf32>
    %40 = vector.shape_cast %39 : vector<16x8xf32> to vector<2x8x8xf32>
    %41 = vector.extract_strided_slice %36 {offsets = [0, 16], sizes = [16, 8], strides = [1, 1]} : vector<16x96xf32> to vector<16x8xf32>
    %42 = vector.shape_cast %41 : vector<16x8xf32> to vector<2x8x8xf32>
    %43 = vector.extract_strided_slice %36 {offsets = [0, 24], sizes = [16, 8], strides = [1, 1]} : vector<16x96xf32> to vector<16x8xf32>
    %44 = vector.shape_cast %43 : vector<16x8xf32> to vector<2x8x8xf32>
    %45 = tpu.concatenate %38, %40, %42, %44 in 0 : vector<2x8x8xf32>, vector<2x8x8xf32>, vector<2x8x8xf32>, vector<2x8x8xf32> -> vector<8x8x8xf32>
    %46 = vector.extract_strided_slice %36 {offsets = [0, 32], sizes = [16, 8], strides = [1, 1]} : vector<16x96xf32> to vector<16x8xf32>
    %47 = vector.shape_cast %46 : vector<16x8xf32> to vector<2x8x8xf32>
    %48 = vector.extract_strided_slice %36 {offsets = [0, 40], sizes = [16, 8], strides = [1, 1]} : vector<16x96xf32> to vector<16x8xf32>
    %49 = vector.shape_cast %48 : vector<16x8xf32> to vector<2x8x8xf32>
    %50 = vector.extract_strided_slice %36 {offsets = [0, 48], sizes = [16, 8], strides = [1, 1]} : vector<16x96xf32> to vector<16x8xf32>
    %51 = vector.shape_cast %50 : vector<16x8xf32> to vector<2x8x8xf32>
    %52 = vector.extract_strided_slice %36 {offsets = [0, 56], sizes = [16, 8], strides = [1, 1]} : vector<16x96xf32> to vector<16x8xf32>
    %53 = vector.shape_cast %52 : vector<16x8xf32> to vector<2x8x8xf32>
    %54 = tpu.concatenate %47, %49, %51, %53 in 0 : vector<2x8x8xf32>, vector<2x8x8xf32>, vector<2x8x8xf32>, vector<2x8x8xf32> -> vector<8x8x8xf32>
    %55 = vector.extract_strided_slice %36 {offsets = [0, 64], sizes = [16, 8], strides = [1, 1]} : vector<16x96xf32> to vector<16x8xf32>
    %56 = vector.shape_cast %55 : vector<16x8xf32> to vector<2x8x8xf32>
    %57 = vector.extract_strided_slice %36 {offsets = [0, 72], sizes = [16, 8], strides = [1, 1]} : vector<16x96xf32> to vector<16x8xf32>
    %58 = vector.shape_cast %57 : vector<16x8xf32> to vector<2x8x8xf32>
    %59 = vector.extract_strided_slice %36 {offsets = [0, 80], sizes = [16, 8], strides = [1, 1]} : vector<16x96xf32> to vector<16x8xf32>
    %60 = vector.shape_cast %59 : vector<16x8xf32> to vector<2x8x8xf32>
    %61 = vector.extract_strided_slice %36 {offsets = [0, 88], sizes = [16, 8], strides = [1, 1]} : vector<16x96xf32> to vector<16x8xf32>
    %62 = vector.shape_cast %61 : vector<16x8xf32> to vector<2x8x8xf32>
    %63 = tpu.concatenate %56, %58, %60, %62 in 0 : vector<2x8x8xf32>, vector<2x8x8xf32>, vector<2x8x8xf32>, vector<2x8x8xf32> -> vector<8x8x8xf32>
    "tpu.trace_start"() <{level = 10 : i32, message = "bqd,bkd->bqk"}> : () -> ()
    %cst_19 = arith.constant dense<0.000000e+00> : vector<8x8x8xf32>
    %64 = tpu.matmul %45, %54, %cst_19 {dimension_numbers = #tpu.dot_dimension_numbers<[2], [2], [1], [1], [0, 0, 0, 1, 1, 1], [0], [0]>} : vector<8x8x8xf32>, vector<8x8x8xf32>, vector<8x8x8xf32> -> vector<8x8x8xf32>
    "tpu.trace_stop"() : () -> ()
    %cst_20 = arith.constant 0.353553385 : f32
    %65 = vector.broadcast %cst_20 : f32 to vector<8x8x8xf32>
    %66 = arith.mulf %64, %65 : vector<8x8x8xf32>
    %cst_21 = arith.constant dense<0xFF800000> : vector<8x8xf32>
    %67 = vector.multi_reduction <maximumf>, %66, %cst_21 [2] : vector<8x8x8xf32> to vector<8x8xf32>
    %68 = vector.shape_cast %67 : vector<8x8xf32> to vector<8x8x1xf32>
    %69 = vector.broadcast %68 : vector<8x8x1xf32> to vector<8x8x8xf32>
    %70 = arith.subf %66, %69 : vector<8x8x8xf32>
    %71 = math.exp %70 : vector<8x8x8xf32>
    %cst_22 = arith.constant dense<0.000000e+00> : vector<8x8xf32>
    %72 = vector.multi_reduction <add>, %71, %cst_22 [2] : vector<8x8x8xf32> to vector<8x8xf32>
    %73 = vector.shape_cast %72 : vector<8x8xf32> to vector<8x8x1xf32>
    %74 = tpu.reciprocal %73 {approx = true} : vector<8x8x1xf32> -> vector<8x8x1xf32>
    %75 = vector.broadcast %74 : vector<8x8x1xf32> to vector<8x8x8xf32>
    %76 = arith.mulf %71, %75 : vector<8x8x8xf32>
    "tpu.trace_start"() <{level = 10 : i32, message = "bqk,bkd->bqd"}> : () -> ()
    %cst_23 = arith.constant dense<0.000000e+00> : vector<8x8x8xf32>
    %77 = tpu.matmul %76, %63, %cst_23 {dimension_numbers = #tpu.dot_dimension_numbers<[2], [1], [1], [2], [0, 0, 0, 1, 1, 2], [0], [0]>} : vector<8x8x8xf32>, vector<8x8x8xf32>, vector<8x8x8xf32> -> vector<8x8x8xf32>
    "tpu.trace_stop"() : () -> ()
    %78 = vector.extract_strided_slice %77 {offsets = [0, 0, 0], sizes = [2, 8, 8], strides = [1, 1, 1]} : vector<8x8x8xf32> to vector<2x8x8xf32>
    %79 = vector.shape_cast %78 : vector<2x8x8xf32> to vector<16x8xf32>
    %80 = vector.extract_strided_slice %77 {offsets = [2, 0, 0], sizes = [2, 8, 8], strides = [1, 1, 1]} : vector<8x8x8xf32> to vector<2x8x8xf32>
    %81 = vector.shape_cast %80 : vector<2x8x8xf32> to vector<16x8xf32>
    %82 = vector.extract_strided_slice %77 {offsets = [4, 0, 0], sizes = [2, 8, 8], strides = [1, 1, 1]} : vector<8x8x8xf32> to vector<2x8x8xf32>
    %83 = vector.shape_cast %82 : vector<2x8x8xf32> to vector<16x8xf32>
    %84 = vector.extract_strided_slice %77 {offsets = [6, 0, 0], sizes = [2, 8, 8], strides = [1, 1, 1]} : vector<8x8x8xf32> to vector<2x8x8xf32>
    %85 = vector.shape_cast %84 : vector<2x8x8xf32> to vector<16x8xf32>
    %86 = tpu.concatenate %79, %81, %83, %85 in 1 : vector<16x8xf32>, vector<16x8xf32>, vector<16x8xf32>, vector<16x8xf32> -> vector<16x32xf32>
    %c0_24 = arith.constant 0 : index
    %c128 = arith.constant 128 : index
    %87 = vector.load %arg2[%c0_24, %c128] : memref<32x640xf32, #tpu.memory_space<vmem>>, vector<32x32xf32>
    %c0_25 = arith.constant 0 : index
    %c256 = arith.constant 256 : index
    %88 = vector.load %arg2[%c0_25, %c256] : memref<32x640xf32, #tpu.memory_space<vmem>>, vector<32x32xf32>
    %cst_26 = arith.constant dense<0.000000e+00> : vector<16x32xf32>
    %89 = tpu.matmul %0, %88, %cst_26 {dimension_numbers = #tpu.dot_dimension_numbers<[1], [0], [0], [1], [0, 0, 1, 1], [], []>} : vector<16x32xf32>, vector<32x32xf32>, vector<16x32xf32> -> vector<16x32xf32>
    %cst_27 = arith.constant dense<0.000000e+00> : vector<16x32xf32>
    %90 = tpu.matmul %86, %87, %cst_27 {dimension_numbers = #tpu.dot_dimension_numbers<[1], [0], [0], [1], [0, 0, 1, 1], [], []>} : vector<16x32xf32>, vector<32x32xf32>, vector<16x32xf32> -> vector<16x32xf32>
    %91 = arith.addf %89, %90 : vector<16x32xf32>
    %92 = vector.broadcast %4 : vector<1x32xf32> to vector<16x32xf32>
    %93 = arith.addf %91, %92 : vector<16x32xf32>
    %94 = arith.addf %0, %93 : vector<16x32xf32>
    %cst_28 = arith.constant dense<0.000000e+00> : vector<16xf32>
    %95 = vector.multi_reduction <add>, %94, %cst_28 [1] : vector<16x32xf32> to vector<16xf32>
    %96 = vector.shape_cast %95 : vector<16xf32> to vector<16x1xf32>
    %cst_29 = arith.constant 3.200000e+01 : f32
    %97 = vector.broadcast %cst_29 : f32 to vector<16x1xf32>
    %98 = arith.divf %96, %97 : vector<16x1xf32>
    %99 = vector.broadcast %98 : vector<16x1xf32> to vector<16x32xf32>
    %100 = arith.subf %94, %99 : vector<16x32xf32>
    %101 = arith.mulf %100, %100 : vector<16x32xf32>
    %cst_30 = arith.constant dense<0.000000e+00> : vector<16xf32>
    %102 = vector.multi_reduction <add>, %101, %cst_30 [1] : vector<16x32xf32> to vector<16xf32>
    %103 = vector.shape_cast %102 : vector<16xf32> to vector<16x1xf32>
    %cst_31 = arith.constant 3.200000e+01 : f32
    %104 = vector.broadcast %cst_31 : f32 to vector<16x1xf32>
    %105 = arith.divf %103, %104 : vector<16x1xf32>
    %106 = vector.broadcast %98 : vector<16x1xf32> to vector<16x32xf32>
    %107 = arith.subf %94, %106 : vector<16x32xf32>
    %cst_32 = arith.constant 9.99999974E-6 : f32
    %108 = vector.broadcast %cst_32 : f32 to vector<16x1xf32>
    %109 = arith.addf %105, %108 : vector<16x1xf32>
    %110 = math.rsqrt %109 : vector<16x1xf32>
    %111 = vector.broadcast %110 : vector<16x1xf32> to vector<16x32xf32>
    %112 = arith.mulf %107, %111 : vector<16x32xf32>
    %113 = vector.broadcast %5 : vector<1x32xf32> to vector<16x32xf32>
    %114 = arith.mulf %112, %113 : vector<16x32xf32>
    %115 = vector.broadcast %6 : vector<1x32xf32> to vector<16x32xf32>
    %116 = arith.addf %114, %115 : vector<16x32xf32>
    %c0_33 = arith.constant 0 : index
    %c384 = arith.constant 384 : index
    %117 = vector.load %arg2[%c0_33, %c384] : memref<32x640xf32, #tpu.memory_space<vmem>>, vector<32x64xf32>
    %cst_34 = arith.constant dense<0.000000e+00> : vector<16x64xf32>
    %118 = tpu.matmul %116, %117, %cst_34 {dimension_numbers = #tpu.dot_dimension_numbers<[1], [0], [0], [1], [0, 0, 1, 1], [], []>} : vector<16x32xf32>, vector<32x64xf32>, vector<16x64xf32> -> vector<16x64xf32>
    %119 = vector.broadcast %7 : vector<1x64xf32> to vector<16x64xf32>
    %120 = arith.addf %118, %119 : vector<16x64xf32>
    %cst_35 = arith.constant 0.000000e+00 : f32
    %121 = vector.broadcast %cst_35 : f32 to vector<16x64xf32>
    %122 = arith.maximumf %120, %121 : vector<16x64xf32>
    %c0_36 = arith.constant 0 : index
    %c512 = arith.constant 512 : index
    %123 = vector.load %arg2[%c0_36, %c512] : memref<32x640xf32, #tpu.memory_space<vmem>>, vector<32x32xf32>
    %c0_37 = arith.constant 0 : index
    %c0_38 = arith.constant 0 : index
    %124 = vector.load %arg3[%c0_37, %c0_38] : memref<64x32xf32, #tpu.memory_space<vmem>>, vector<64x32xf32>
    %cst_39 = arith.constant dense<0.000000e+00> : vector<16x32xf32>
    %125 = tpu.matmul %94, %123, %cst_39 {dimension_numbers = #tpu.dot_dimension_numbers<[1], [0], [0], [1], [0, 0, 1, 1], [], []>} : vector<16x32xf32>, vector<32x32xf32>, vector<16x32xf32> -> vector<16x32xf32>
    %cst_40 = arith.constant dense<0.000000e+00> : vector<16x32xf32>
    %126 = tpu.matmul %122, %124, %cst_40 {dimension_numbers = #tpu.dot_dimension_numbers<[1], [0], [0], [1], [0, 0, 1, 1], [], []>} : vector<16x64xf32>, vector<64x32xf32>, vector<16x32xf32> -> vector<16x32xf32>
    %127 = arith.addf %125, %126 : vector<16x32xf32>
    %128 = vector.broadcast %8 : vector<1x32xf32> to vector<16x32xf32>
    %129 = arith.addf %127, %128 : vector<16x32xf32>
    %130 = arith.addf %94, %129 : vector<16x32xf32>
    %cst_41 = arith.constant dense<0.000000e+00> : vector<16xf32>
    %131 = vector.multi_reduction <add>, %130, %cst_41 [1] : vector<16x32xf32> to vector<16xf32>
    %132 = vector.shape_cast %131 : vector<16xf32> to vector<16x1xf32>
    %cst_42 = arith.constant 3.200000e+01 : f32
    %133 = vector.broadcast %cst_42 : f32 to vector<16x1xf32>
    %134 = arith.divf %132, %133 : vector<16x1xf32>
    %135 = vector.broadcast %134 : vector<16x1xf32> to vector<16x32xf32>
    %136 = arith.subf %130, %135 : vector<16x32xf32>
    %137 = arith.mulf %136, %136 : vector<16x32xf32>
    %cst_43 = arith.constant dense<0.000000e+00> : vector<16xf32>
    %138 = vector.multi_reduction <add>, %137, %cst_43 [1] : vector<16x32xf32> to vector<16xf32>
    %139 = vector.shape_cast %138 : vector<16xf32> to vector<16x1xf32>
    %cst_44 = arith.constant 3.200000e+01 : f32
    %140 = vector.broadcast %cst_44 : f32 to vector<16x1xf32>
    %141 = arith.divf %139, %140 : vector<16x1xf32>
    %142 = vector.broadcast %134 : vector<16x1xf32> to vector<16x32xf32>
    %143 = arith.subf %130, %142 : vector<16x32xf32>
    %cst_45 = arith.constant 9.99999974E-6 : f32
    %144 = vector.broadcast %cst_45 : f32 to vector<16x1xf32>
    %145 = arith.addf %141, %144 : vector<16x1xf32>
    %146 = math.rsqrt %145 : vector<16x1xf32>
    %147 = vector.broadcast %146 : vector<16x1xf32> to vector<16x32xf32>
    %148 = arith.mulf %143, %147 : vector<16x32xf32>
    %149 = vector.broadcast %9 : vector<1x32xf32> to vector<16x32xf32>
    %150 = arith.mulf %148, %149 : vector<16x32xf32>
    %151 = vector.broadcast %10 : vector<1x32xf32> to vector<16x32xf32>
    %152 = arith.addf %150, %151 : vector<16x32xf32>
    %c0_46 = arith.constant 0 : index
    %c0_47 = arith.constant 0 : index
    %153 = vector.load %arg5[%c0_46, %c0_47] : memref<16x32xf32, #tpu.memory_space<vmem>>, vector<16x32xf32>
    tpu.vector_store %arg5[%c0_46, %c0_47], %152 {strides = array<i32>} : memref<16x32xf32, #tpu.memory_space<vmem>>, vector<16x32xf32>,
    return
  }
  func.func @transform_0(%arg0: i32) -> (i32, i32) {
    %c0_i32 = arith.constant 0 : i32
    %c0_i32_0 = arith.constant 0 : i32
    return %arg0, %c0_i32 : i32, i32
  }
  func.func @transform_1(%arg0: i32) -> (i32, i32) {
    %c0_i32 = arith.constant 0 : i32
    %c0_i32_0 = arith.constant 0 : i32
    %c0_i32_1 = arith.constant 0 : i32
    return %c0_i32, %c0_i32_0 : i32, i32
  }
  func.func @transform_2(%arg0: i32) -> (i32, i32) {
    %c0_i32 = arith.constant 0 : i32
    %c0_i32_0 = arith.constant 0 : i32
    %c0_i32_1 = arith.constant 0 : i32
    return %c0_i32, %c0_i32_0 : i32, i32
  }
  func.func @transform_3(%arg0: i32) -> (i32, i32) {
    %c0_i32 = arith.constant 0 : i32
    %c0_i32_0 = arith.constant 0 : i32
    %c0_i32_1 = arith.constant 0 : i32
    return %c0_i32, %c0_i32_0 : i32, i32
  }
  func.func @transform_4(%arg0: i32) -> (i32, i32) {
    %c0_i32 = arith.constant 0 : i32
    %c0_i32_0 = arith.constant 0 : i32
    return %arg0, %c0_i32 : i32, i32
  }
}

</mosaic_0001>

<llo_original>
// kernel: tpu_custom_call.1
$region0: #{tpu_custom_call.1}
  #allocation0 [shape = 'u32[]', space=smem, size = 0x4, offset = 0x4, fixed_abs, tag = 'smem constant byte address 0x4 - core index']
  #allocation1 [shape = 'u32[72,128]{1,0:T(1,128)}', space=vmem, size = 0x9000, scoped, tag = 'internal scratch']
  %s0 = inlined_call_operand.vmem [shape: f32[16,32], index: 0, kind: input, shape index: {}]
  %s1 = inlined_call_operand.hbm [shape: f32[32,640], index: 1, kind: input, shape index: {}]
  %s2 = inlined_call_operand.vmem [shape: f32[64,32], index: 2, kind: input, shape index: {}]
  %s3 = inlined_call_operand.vmem [shape: f32[10,128], index: 3, kind: input, shape index: {}]
  %s4 = inlined_call_operand.hbm [shape: f32[16,32], index: 4, kind: output, shape index: {}]
  %s5 = sld [smem:[#allocation0]]
  $region30: #{tpu_custom_call.1} parent=0
    _
  %s7 = ssub.s32 1, %s5
  %s8 = scalar_select 0, %s7, %s5
  $region1: #{tpu_custom_call.1} parent=0
    #allocation2 [shape = 'u8[81920]{0}', space=vmem, size = 0x14000, scoped, tag = 'input window, operand 1, single buffered']
    #allocation3 [shape = 's32[1]{0}', space=sflag, size = 0x4, scoped, tag = 'scoped memory for tpu_custom_call.1']
    #allocation4 [shape = 's32[1]{0}', space=sflag, size = 0x4, scoped, tag = 'scoped memory for tpu_custom_call.1']
    #allocation5 [shape = 'u8[8192]{0}', space=vmem, size = 0x2000, scoped, tag = 'output window, operand 0, single buffered']
    %9 = vsyncpa [#allocation3], 0
    %10 = vsyncpa [#allocation4], 0
    // Predicated region
    $region2: #{tpu_custom_call.1} parent=1 // pred_check
      _
    $region3: #{tpu_custom_call.1} parent=1 // pred_check_branch
      %12 = sbr.rel (0) target = $region5
    $region4: #{tpu_custom_call.1} parent=1 // pred_region
      _
    $region5: #{tpu_custom_call.1} parent=1 // pred_fallthru
      _
    // Predicated region
    $region6: #{tpu_custom_call.1} parent=1 // pred_check
      _
    $region7: #{tpu_custom_call.1} parent=1 // pred_check_branch
      %14 = sbr.rel (0) target = $region9
    $region8: #{tpu_custom_call.1} parent=1 // pred_region
      %16 = vsyncadd [#allocation3], 0
      %s17 = sshll.u32 %s1, 4
      %s18 = int_to_ptr.hbm [resolvable:$true] %s17
      %s19 = sshll.u32 [#allocation2], 4
      %s20 = int_to_ptr.vmem [resolvable:$true] %s19
      %25 = dma.hbm_to_vmem [thread:$0]  %s18, 2560, %s20, [#allocation3], 640, 640, 40
    $region9: #{tpu_custom_call.1} parent=1 // pred_fallthru
      _
    // Predicated region
    $region10: #{tpu_custom_call.1} parent=1 // pred_check
      _
    $region11: #{tpu_custom_call.1} parent=1 // pred_check_branch
      %27 = sbr.rel (0) target = $region13
    $region12: #{tpu_custom_call.1} parent=1 // pred_region
      _
    $region13: #{tpu_custom_call.1} parent=1 // pred_fallthru
      _
    // Predicated region
    $region14: #{tpu_custom_call.1} parent=1 // pred_check
      _
    $region15: #{tpu_custom_call.1} parent=1 // pred_check_branch
      %29 = sbr.rel (0) target = $region17
    $region16: #{tpu_custom_call.1} parent=1 // pred_region
      _
    $region17: #{tpu_custom_call.1} parent=1 // pred_fallthru
      _
    // Predicated region
    $region18: #{tpu_custom_call.1} parent=1 // pred_check
      _
    $region19: #{tpu_custom_call.1} parent=1 // pred_check_branch
      %31 = sbr.rel (0) target = $region21
    $region20: #{tpu_custom_call.1} parent=1 // pred_region
      %33 = dma.done [#allocation3], 2560
    $region21: #{tpu_custom_call.1} parent=1 // pred_fallthru
      _
    %v34 = vld [vmem:[%s0] sm:$0xff]
    %v35 = vld [vmem:[%s0 + $0x8] sm:$0xff]
    %v36 = vld [vmem:[%s3] sm:$0x1]
    %v37 = vld [vmem:[%s3 + $0x1] sm:$0x1]
    %v38 = vld [vmem:[%s3 + $0x2] sm:$0x1]
    %v39 = vld [vmem:[%s3 + $0x3] sm:$0x1]
    %v40 = vld [vmem:[%s3 + $0x4] sm:$0x1]
    %v41 = vld [vmem:[%s3 + $0x5] sm:$0x1]
    %v42 = vld [vmem:[%s3 + $0x6] sm:$0x1]
    %v43 = vld [vmem:[%s3 + $0x7] sm:$0x1]
    %v44 = vld [vmem:[%s3 + $0x8] sm:$0x1]
    %v45 = vld [vmem:[%s3 + $0x9] sm:$0x1]
    %vm46 = vcmask 261120
    %v47 = vsel %vm46, %v34, 0.0
    %48 = vadd.xlane.f32.xlu0 %v47
    %v49 = vpop.xlane.xlu0 %48
    %v50 = vsel %vm46, %v35, 0.0
    %51 = vadd.xlane.f32.xlu0 %v50
    %v52 = vpop.xlane.xlu0 %51
    %v53 = vrcp.pop 32.0
    %v54 = vmul.f32 32.0, %v53
    %v55 = vsub.f32 1.0, %v54
    %v56 = vmul.f32 %v53, %v55
    %v57 = vadd.f32 %v53, %v56
    %vm58 = vweird.f32 %v53
    %v59 = vsel %vm58, %v53, %v57
    %v60 = vmul.f32 %v49, %v59
    %v61 = vmul.f32 %v52, %v59
    %v62 = vsub.f32 %v34, %v60
    %v63 = vsub.f32 %v35, %v61
    %v64 = vmul.f32 %v62, %v62
    %v65 = vmul.f32 %v63, %v63
    %v66 = vsel %vm46, %v64, 0.0
    %67 = vadd.xlane.f32.xlu0 %v66
    %v68 = vpop.xlane.xlu0 %67
    %v69 = vsel %vm46, %v65, 0.0
    %70 = vadd.xlane.f32.xlu0 %v69
    %v71 = vpop.xlane.xlu0 %70
    %v72 = vmul.f32 %v68, %v59
    %v73 = vmul.f32 %v71, %v59
    %v74 = vadd.f32 %v72, 1e-05
    %v75 = vadd.f32 %v73, 1e-05
    %v76 = vrsqrt.pop %v74
    %v77 = vmul.f32 %v76, %v74
    %v78 = vmul.f32 %v77, %v76
    %v79 = vmul.f32 0.5, %v78
    %v80 = vsub.f32 1.5, %v79
    %v81 = vmul.f32 %v76, %v80
    %vm82 = vweird.f32 %v74
    %vm83 = vweird.f32 %v76
    %vm84 = vmor %vm82, %vm83
    %v85 = vsel %vm84, %v76, %v81
    %v86 = vrsqrt.pop %v75
    %v87 = vmul.f32 %v86, %v75
    %v88 = vmul.f32 %v87, %v86
    %v89 = vmul.f32 0.5, %v88
    %v90 = vsub.f32 1.5, %v89
    %v91 = vmul.f32 %v86, %v90
    %vm92 = vweird.f32 %v75
    %vm93 = vweird.f32 %v86
    %vm94 = vmor %vm92, %vm93
    %v95 = vsel %vm94, %v86, %v91
    %v96 = vmul.f32 %v62, %v85
    %v97 = vmul.f32 %v63, %v95
    %v98 = vperm.slane %v36, 0
    %v99 = vmul.f32 %v96, %v98
    %v100 = vmul.f32 %v97, %v98
    %v101 = vperm.slane %v37, 0
    %v102 = vadd.f32 %v99, %v101
    %v103 = vadd.f32 %v100, %v101
    %v104 = vld [vmem:[#allocation2] sm:$0xff]
    %v105 = vld [vmem:[#allocation2 + $0x28] sm:$0xff]
    %v106 = vld [vmem:[#allocation2 + $0x50] sm:$0xff]
    %v107 = vld [vmem:[#allocation2 + $0x78] sm:$0xff]
    %v108 = vperm.slane %v38, 0
    %v110 = vsel %vm46, %v102, 0
    %v113 = vsel %vm46, %v103, 0
    %115 = vmatpush.msra.mxu0 0.0
    %116 = vmatpush.msra.mxu0 0.0
    %117 = vmatpush.msra.mxu0 0.0
    %118 = vmatpush.msra.mxu0 0.0
    %119 = vmatpush.msra.mxu0 0.0
    %120 = vmatpush.msra.mxu0 0.0
    %121 = vmatpush.msra.mxu0 0.0
    %122 = vmatpush.msra.mxu0 0.0
    %123 = vmatpush.msra.mxu0 0.0
    %124 = vmatpush.msra.mxu0 0.0
    %125 = vmatpush.msra.mxu0 0.0
    %126 = vmatpush.msra.mxu0 0.0
    %127 = vmatpush.msra.mxu0 %v107
    %128 = vmatpush.msra.mxu0 %v106
    %129 = vmatpush.msra.mxu0 %v105
    %130 = vmatpush.msra.mxu0 %v104
    %131 = vmatmul.f32.gmra.mxu0 %v110
    %v132 = vpop.f32.mrf.mxu0
    %v133 = vadd.f32 %v108, %v132
    %134 = vmatmul.f32.gmra.mxu0 %v113
    %v135 = vpop.f32.mrf.mxu0
    %v136 = vadd.f32 %v108, %v135
    %137 = vdwg.mxu0
    %140 = vrot.lane.b32.xlu0 %v133, 120
    %v141 = vpop.permute.xlu0 %140
    %142 = vrot.lane.b32.xlu0 %v136, 120
    %v143 = vpop.permute.xlu0 %142
    %144 = vrot.lane.b32.xlu0 %v133, 112
    %v145 = vpop.permute.xlu0 %144
    %146 = vrot.lane.b32.xlu0 %v136, 112
    %v147 = vpop.permute.xlu0 %146
    %148 = vrot.lane.b32.xlu0 %v133, 104
    %v149 = vpop.permute.xlu0 %148
    %150 = vrot.lane.b32.xlu0 %v136, 104
    %v151 = vpop.permute.xlu0 %150
    %152 = vrot.lane.b32.xlu0 %v133, 96
    %v153 = vpop.permute.xlu0 %152
    %vm154 = vcmask 64512
    %v155 = vsel %vm154, %v133, 0
    %v157 = vsel %vm154, %v153, 0
    %159 = vmatpush.xpose.msra.mxu0 0.0
    %160 = vmatpush.xpose.msra.mxu0 0.0
    %161 = vmatpush.xpose.msra.mxu0 0.0
    %162 = vmatpush.xpose.msra.mxu0 0.0
    %163 = vmatpush.xpose.msra.mxu0 0.0
    %164 = vmatpush.xpose.msra.mxu0 0.0
    %165 = vmatpush.xpose.msra.mxu0 0.0
    %166 = vmatpush.xpose.msra.mxu0 0.0
    %167 = vmatpush.xpose.msra.mxu0 0.0
    %168 = vmatpush.xpose.msra.mxu0 0.0
    %169 = vmatpush.xpose.msra.mxu0 0.0
    %170 = vmatpush.xpose.msra.mxu0 0.0
    %171 = vmatpush.xpose.msra.mxu0 0.0
    %172 = vmatpush.xpose.msra.mxu0 0.0
    %173 = vmatpush.xpose.msra.mxu0 0.0
    %174 = vmatpush.xpose.msra.mxu0 %v157
    %175 = vmatmul.f32.gmra.mxu0 %v155
    %v176 = vpop.f32.mrf.mxu0
    %v177 = vadd.f32 0.0, %v176
    %178 = vdwg.mxu0
    %179 = vrot.lane.b32.xlu0 %v136, 96
    %v180 = vpop.permute.xlu0 %179
    %v181 = vsel %vm154, %v136, 0
    %v183 = vsel %vm154, %v180, 0
    %185 = vmatpush.xpose.msra.mxu0 0.0
    %186 = vmatpush.xpose.msra.mxu0 0.0
    %187 = vmatpush.xpose.msra.mxu0 0.0
    %188 = vmatpush.xpose.msra.mxu0 0.0
    %189 = vmatpush.xpose.msra.mxu0 0.0
    %190 = vmatpush.xpose.msra.mxu0 0.0
    %191 = vmatpush.xpose.msra.mxu0 0.0
    %192 = vmatpush.xpose.msra.mxu0 0.0
    %193 = vmatpush.xpose.msra.mxu0 0.0
    %194 = vmatpush.xpose.msra.mxu0 0.0
    %195 = vmatpush.xpose.msra.mxu0 0.0
    %196 = vmatpush.xpose.msra.mxu0 0.0
    %197 = vmatpush.xpose.msra.mxu0 0.0
    %198 = vmatpush.xpose.msra.mxu0 0.0
    %199 = vmatpush.xpose.msra.mxu0 0.0
    %200 = vmatpush.xpose.msra.mxu0 %v183
    %201 = vmatmul.f32.gmra.mxu0 %v181
    %v202 = vpop.f32.mrf.mxu0
    %v203 = vadd.f32 0.0, %v202
    %204 = vdwg.mxu0
    %205 = vrot.lane.b32.xlu0 %v141, 96
    %v206 = vpop.permute.xlu0 %205
    %v207 = vsel %vm154, %v141, 0
    %v209 = vsel %vm154, %v206, 0
    %211 = vmatpush.xpose.msra.mxu0 0.0
    %212 = vmatpush.xpose.msra.mxu0 0.0
    %213 = vmatpush.xpose.msra.mxu0 0.0
    %214 = vmatpush.xpose.msra.mxu0 0.0
    %215 = vmatpush.xpose.msra.mxu0 0.0
    %216 = vmatpush.xpose.msra.mxu0 0.0
    %217 = vmatpush.xpose.msra.mxu0 0.0
    %218 = vmatpush.xpose.msra.mxu0 0.0
    %219 = vmatpush.xpose.msra.mxu0 0.0
    %220 = vmatpush.xpose.msra.mxu0 0.0
    %221 = vmatpush.xpose.msra.mxu0 0.0
    %222 = vmatpush.xpose.msra.mxu0 0.0
    %223 = vmatpush.xpose.msra.mxu0 0.0
    %224 = vmatpush.xpose.msra.mxu0 0.0
    %225 = vmatpush.xpose.msra.mxu0 0.0
    %226 = vmatpush.xpose.msra.mxu0 %v209
    %227 = vmatmul.f32.gmra.mxu0 %v207
    %v228 = vpop.f32.mrf.mxu0
    %v229 = vadd.f32 0.0, %v228
    %230 = vdwg.mxu0
    %231 = vrot.lane.b32.xlu0 %v143, 96
    %v232 = vpop.permute.xlu0 %231
    %v233 = vsel %vm154, %v143, 0
    %v235 = vsel %vm154, %v232, 0
    %237 = vmatpush.xpose.msra.mxu0 0.0
    %238 = vmatpush.xpose.msra.mxu0 0.0
    %239 = vmatpush.xpose.msra.mxu0 0.0
    %240 = vmatpush.xpose.msra.mxu0 0.0
    %241 = vmatpush.xpose.msra.mxu0 0.0
    %242 = vmatpush.xpose.msra.mxu0 0.0
    %243 = vmatpush.xpose.msra.mxu0 0.0
    %244 = vmatpush.xpose.msra.mxu0 0.0
    %245 = vmatpush.xpose.msra.mxu0 0.0
    %246 = vmatpush.xpose.msra.mxu0 0.0
    %247 = vmatpush.xpose.msra.mxu0 0.0
    %248 = vmatpush.xpose.msra.mxu0 0.0
    %249 = vmatpush.xpose.msra.mxu0 0.0
    %250 = vmatpush.xpose.msra.mxu0 0.0
    %251 = vmatpush.xpose.msra.mxu0 0.0
    %252 = vmatpush.xpose.msra.mxu0 %v235
    %253 = vmatmul.f32.gmra.mxu0 %v233
    %v254 = vpop.f32.mrf.mxu0
    %v255 = vadd.f32 0.0, %v254
    %256 = vdwg.mxu0
    %257 = vrot.lane.b32.xlu0 %v145, 96
    %v258 = vpop.permute.xlu0 %257
    %v259 = vsel %vm154, %v145, 0
    %v261 = vsel %vm154, %v258, 0
    %263 = vmatpush.xpose.msra.mxu0 0.0
    %264 = vmatpush.xpose.msra.mxu0 0.0
    %265 = vmatpush.xpose.msra.mxu0 0.0
    %266 = vmatpush.xpose.msra.mxu0 0.0
    %267 = vmatpush.xpose.msra.mxu0 0.0
    %268 = vmatpush.xpose.msra.mxu0 0.0
    %269 = vmatpush.xpose.msra.mxu0 0.0
    %270 = vmatpush.xpose.msra.mxu0 0.0
    %271 = vmatpush.xpose.msra.mxu0 0.0
    %272 = vmatpush.xpose.msra.mxu0 0.0
    %273 = vmatpush.xpose.msra.mxu0 0.0
    %274 = vmatpush.xpose.msra.mxu0 0.0
    %275 = vmatpush.xpose.msra.mxu0 0.0
    %276 = vmatpush.xpose.msra.mxu0 0.0
    %277 = vmatpush.xpose.msra.mxu0 0.0
    %278 = vmatpush.xpose.msra.mxu0 %v261
    %279 = vmatmul.f32.gmra.mxu0 %v259
    %v280 = vpop.f32.mrf.mxu0
    %v281 = vadd.f32 0.0, %v280
    %282 = vdwg.mxu0
    %283 = vrot.lane.b32.xlu0 %v147, 96
    %v284 = vpop.permute.xlu0 %283
    %v285 = vsel %vm154, %v147, 0
    %v287 = vsel %vm154, %v284, 0
    %289 = vmatpush.xpose.msra.mxu0 0.0
    %290 = vmatpush.xpose.msra.mxu0 0.0
    %291 = vmatpush.xpose.msra.mxu0 0.0
    %292 = vmatpush.xpose.msra.mxu0 0.0
    %293 = vmatpush.xpose.msra.mxu0 0.0
    %294 = vmatpush.xpose.msra.mxu0 0.0
    %295 = vmatpush.xpose.msra.mxu0 0.0
    %296 = vmatpush.xpose.msra.mxu0 0.0
    %297 = vmatpush.xpose.msra.mxu0 0.0
    %298 = vmatpush.xpose.msra.mxu0 0.0
    %299 = vmatpush.xpose.msra.mxu0 0.0
    %300 = vmatpush.xpose.msra.mxu0 0.0
    %301 = vmatpush.xpose.msra.mxu0 0.0
    %302 = vmatpush.xpose.msra.mxu0 0.0
    %303 = vmatpush.xpose.msra.mxu0 0.0
    %304 = vmatpush.xpose.msra.mxu0 %v287
    %305 = vmatmul.f32.gmra.mxu0 %v285
    %v306 = vpop.f32.mrf.mxu0
    %v307 = vadd.f32 0.0, %v306
    %308 = vdwg.mxu0
    %309 = vrot.lane.b32.xlu0 %v149, 96
    %v310 = vpop.permute.xlu0 %309
    %v311 = vsel %vm154, %v149, 0
    %v313 = vsel %vm154, %v310, 0
    %315 = vmatpush.xpose.msra.mxu0 0.0
    %316 = vmatpush.xpose.msra.mxu0 0.0
    %317 = vmatpush.xpose.msra.mxu0 0.0
    %318 = vmatpush.xpose.msra.mxu0 0.0
    %319 = vmatpush.xpose.msra.mxu0 0.0
    %320 = vmatpush.xpose.msra.mxu0 0.0
    %321 = vmatpush.xpose.msra.mxu0 0.0
    %322 = vmatpush.xpose.msra.mxu0 0.0
    %323 = vmatpush.xpose.msra.mxu0 0.0
    %324 = vmatpush.xpose.msra.mxu0 0.0
    %325 = vmatpush.xpose.msra.mxu0 0.0
    %326 = vmatpush.xpose.msra.mxu0 0.0
    %327 = vmatpush.xpose.msra.mxu0 0.0
    %328 = vmatpush.xpose.msra.mxu0 0.0
    %329 = vmatpush.xpose.msra.mxu0 0.0
    %330 = vmatpush.xpose.msra.mxu0 %v313
    %331 = vmatmul.f32.gmra.mxu0 %v311
    %v332 = vpop.f32.mrf.mxu0
    %v333 = vadd.f32 0.0, %v332
    %334 = vdwg.mxu0
    %335 = vrot.lane.b32.xlu0 %v151, 96
    %v336 = vpop.permute.xlu0 %335
    %v337 = vsel %vm154, %v151, 0
    %v339 = vsel %vm154, %v336, 0
    %341 = vmatpush.xpose.msra.mxu0 0.0
    %342 = vmatpush.xpose.msra.mxu0 0.0
    %343 = vmatpush.xpose.msra.mxu0 0.0
    %344 = vmatpush.xpose.msra.mxu0 0.0
    %345 = vmatpush.xpose.msra.mxu0 0.0
    %346 = vmatpush.xpose.msra.mxu0 0.0
    %347 = vmatpush.xpose.msra.mxu0 0.0
    %348 = vmatpush.xpose.msra.mxu0 0.0
    %349 = vmatpush.xpose.msra.mxu0 0.0
    %350 = vmatpush.xpose.msra.mxu0 0.0
    %351 = vmatpush.xpose.msra.mxu0 0.0
    %352 = vmatpush.xpose.msra.mxu0 0.0
    %353 = vmatpush.xpose.msra.mxu0 0.0
    %354 = vmatpush.xpose.msra.mxu0 0.0
    %355 = vmatpush.xpose.msra.mxu0 0.0
    %356 = vmatpush.xpose.msra.mxu0 %v339
    %357 = vmatmul.f32.gmra.mxu0 %v337
    %v358 = vpop.f32.mrf.mxu0
    %v359 = vadd.f32 0.0, %v358
    %360 = vdwg.mxu0
    %v361 = vmul.f32 %v177, 0.35355338
    %v362 = vmul.f32 %v203, 0.35355338
    %v363 = vmul.f32 %v229, 0.35355338
    %v364 = vmul.f32 %v255, 0.35355338
    %v365 = vmul.f32 %v281, 0.35355338
    %v366 = vmul.f32 %v307, 0.35355338
    %v367 = vmul.f32 %v333, 0.35355338
    %v368 = vmul.f32 %v359, 0.35355338
    %v369 = vsel %vm154, %v361, -inf
    %370 = vmax.xlane.f32.xlu0 %v369
    %v371 = vpop.xlane.xlu0 %370
    %v372 = vsel %vm154, %v362, -inf
    %373 = vmax.xlane.f32.xlu0 %v372
    %v374 = vpop.xlane.xlu0 %373
    %v375 = vsel %vm154, %v363, -inf
    %376 = vmax.xlane.f32.xlu0 %v375
    %v377 = vpop.xlane.xlu0 %376
    %v378 = vsel %vm154, %v364, -inf
    %379 = vmax.xlane.f32.xlu0 %v378
    %v380 = vpop.xlane.xlu0 %379
    %v381 = vsel %vm154, %v365, -inf
    %382 = vmax.xlane.f32.xlu0 %v381
    %v383 = vpop.xlane.xlu0 %382
    %v384 = vsel %vm154, %v366, -inf
    %385 = vmax.xlane.f32.xlu0 %v384
    %v386 = vpop.xlane.xlu0 %385
    %v387 = vsel %vm154, %v367, -inf
    %388 = vmax.xlane.f32.xlu0 %v387
    %v389 = vpop.xlane.xlu0 %388
    %v390 = vsel %vm154, %v368, -inf
    %391 = vmax.xlane.f32.xlu0 %v390
    %v392 = vpop.xlane.xlu0 %391
    %v393 = vsub.f32 %v361, %v371
    %v394 = vsub.f32 %v362, %v374
    %v395 = vsub.f32 %v363, %v377
    %v396 = vsub.f32 %v364, %v380
    %v397 = vsub.f32 %v365, %v383
    %v398 = vsub.f32 %v366, %v386
    %v399 = vsub.f32 %v367, %v389
    %v400 = vsub.f32 %v368, %v392
    %v401 = vmul.f32 %v393, 1.442695
    %v402 = vpow.pop %v401
    %v403 = vmul.f32 %v394, 1.442695
    %v404 = vpow.pop %v403
    %v405 = vmul.f32 %v395, 1.442695
    %v406 = vpow.pop %v405
    %v407 = vmul.f32 %v396, 1.442695
    %v408 = vpow.pop %v407
    %v409 = vmul.f32 %v397, 1.442695
    %v410 = vpow.pop %v409
    %v411 = vmul.f32 %v398, 1.442695
    %v412 = vpow.pop %v411
    %v413 = vmul.f32 %v399, 1.442695
    %v414 = vpow.pop %v413
    %v415 = vmul.f32 %v400, 1.442695
    %v416 = vpow.pop %v415
    %v417 = vsel %vm154, %v402, 0.0
    %418 = vadd.xlane.f32.xlu0 %v417
    %v419 = vpop.xlane.xlu0 %418
    %v420 = vsel %vm154, %v404, 0.0
    %421 = vadd.xlane.f32.xlu0 %v420
    %v422 = vpop.xlane.xlu0 %421
    %v423 = vsel %vm154, %v406, 0.0
    %424 = vadd.xlane.f32.xlu0 %v423
    %v425 = vpop.xlane.xlu0 %424
    %v426 = vsel %vm154, %v408, 0.0
    %427 = vadd.xlane.f32.xlu0 %v426
    %v428 = vpop.xlane.xlu0 %427
    %v429 = vsel %vm154, %v410, 0.0
    %430 = vadd.xlane.f32.xlu0 %v429
    %v431 = vpop.xlane.xlu0 %430
    %v432 = vsel %vm154, %v412, 0.0
    %433 = vadd.xlane.f32.xlu0 %v432
    %v434 = vpop.xlane.xlu0 %433
    %v435 = vsel %vm154, %v414, 0.0
    %436 = vadd.xlane.f32.xlu0 %v435
    %v437 = vpop.xlane.xlu0 %436
    %v438 = vsel %vm154, %v416, 0.0
    %439 = vadd.xlane.f32.xlu0 %v438
    %v440 = vpop.xlane.xlu0 %439
    %v441 = vrcp.pop %v419
    %v442 = vrcp.pop %v422
    %v443 = vrcp.pop %v425
    %v444 = vrcp.pop %v428
    %v445 = vrcp.pop %v431
    %v446 = vrcp.pop %v434
    %v447 = vrcp.pop %v437
    %v448 = vrcp.pop %v440
    %v449 = vmul.f32 %v402, %v441
    %v450 = vmul.f32 %v404, %v442
    %v451 = vmul.f32 %v406, %v443
    %v452 = vmul.f32 %v408, %v444
    %v453 = vmul.f32 %v410, %v445
    %v454 = vmul.f32 %v412, %v446
    %v455 = vmul.f32 %v414, %v447
    %v456 = vmul.f32 %v416, %v448
    %457 = vrot.lane.b32.xlu0 %v133, 64
    %v458 = vpop.permute.xlu0 %457
    %v461 = vsel %vm154, %v449, 0
    %463 = vmatpush.msra.mxu0 0.0
    %464 = vmatpush.msra.mxu0 0.0
    %465 = vmatpush.msra.mxu0 0.0
    %466 = vmatpush.msra.mxu0 0.0
    %467 = vmatpush.msra.mxu0 0.0
    %468 = vmatpush.msra.mxu0 0.0
    %469 = vmatpush.msra.mxu0 0.0
    %470 = vmatpush.msra.mxu0 0.0
    %471 = vmatpush.msra.mxu0 0.0
    %472 = vmatpush.msra.mxu0 0.0
    %473 = vmatpush.msra.mxu0 0.0
    %474 = vmatpush.msra.mxu0 0.0
    %475 = vmatpush.msra.mxu0 0.0
    %476 = vmatpush.msra.mxu0 0.0
    %477 = vmatpush.msra.mxu0 0.0
    %478 = vmatpush.msra.mxu0 %v458
    %479 = vmatmul.f32.gmra.mxu0 %v461
    %v480 = vpop.f32.mrf.mxu0
    %v481 = vadd.f32 0.0, %v480
    %482 = vdwg.mxu0
    %483 = vrot.lane.b32.xlu0 %v136, 64
    %v484 = vpop.permute.xlu0 %483
    %v487 = vsel %vm154, %v450, 0
    %489 = vmatpush.msra.mxu0 0.0
    %490 = vmatpush.msra.mxu0 0.0
    %491 = vmatpush.msra.mxu0 0.0
    %492 = vmatpush.msra.mxu0 0.0
    %493 = vmatpush.msra.mxu0 0.0
    %494 = vmatpush.msra.mxu0 0.0
    %495 = vmatpush.msra.mxu0 0.0
    %496 = vmatpush.msra.mxu0 0.0
    %497 = vmatpush.msra.mxu0 0.0
    %498 = vmatpush.msra.mxu0 0.0
    %499 = vmatpush.msra.mxu0 0.0
    %500 = vmatpush.msra.mxu0 0.0
    %501 = vmatpush.msra.mxu0 0.0
    %502 = vmatpush.msra.mxu0 0.0
    %503 = vmatpush.msra.mxu0 0.0
    %504 = vmatpush.msra.mxu0 %v484
    %505 = vmatmul.f32.gmra.mxu0 %v487
    %v506 = vpop.f32.mrf.mxu0
    %v507 = vadd.f32 0.0, %v506
    %508 = vdwg.mxu0
    %509 = vrot.lane.b32.xlu0 %v141, 64
    %v510 = vpop.permute.xlu0 %509
    %v513 = vsel %vm154, %v451, 0
    %515 = vmatpush.msra.mxu0 0.0
    %516 = vmatpush.msra.mxu0 0.0
    %517 = vmatpush.msra.mxu0 0.0
    %518 = vmatpush.msra.mxu0 0.0
    %519 = vmatpush.msra.mxu0 0.0
    %520 = vmatpush.msra.mxu0 0.0
    %521 = vmatpush.msra.mxu0 0.0
    %522 = vmatpush.msra.mxu0 0.0
    %523 = vmatpush.msra.mxu0 0.0
    %524 = vmatpush.msra.mxu0 0.0
    %525 = vmatpush.msra.mxu0 0.0
    %526 = vmatpush.msra.mxu0 0.0
    %527 = vmatpush.msra.mxu0 0.0
    %528 = vmatpush.msra.mxu0 0.0
    %529 = vmatpush.msra.mxu0 0.0
    %530 = vmatpush.msra.mxu0 %v510
    %531 = vmatmul.f32.gmra.mxu0 %v513
    %v532 = vpop.f32.mrf.mxu0
    %v533 = vadd.f32 0.0, %v532
    %534 = vdwg.mxu0
    %535 = vrot.lane.b32.xlu0 %v143, 64
    %v536 = vpop.permute.xlu0 %535
    %v539 = vsel %vm154, %v452, 0
    %541 = vmatpush.msra.mxu0 0.0
    %542 = vmatpush.msra.mxu0 0.0
    %543 = vmatpush.msra.mxu0 0.0
    %544 = vmatpush.msra.mxu0 0.0
    %545 = vmatpush.msra.mxu0 0.0
    %546 = vmatpush.msra.mxu0 0.0
    %547 = vmatpush.msra.mxu0 0.0
    %548 = vmatpush.msra.mxu0 0.0
    %549 = vmatpush.msra.mxu0 0.0
    %550 = vmatpush.msra.mxu0 0.0
    %551 = vmatpush.msra.mxu0 0.0
    %552 = vmatpush.msra.mxu0 0.0
    %553 = vmatpush.msra.mxu0 0.0
    %554 = vmatpush.msra.mxu0 0.0
    %555 = vmatpush.msra.mxu0 0.0
    %556 = vmatpush.msra.mxu0 %v536
    %557 = vmatmul.f32.gmra.mxu0 %v539
    %v558 = vpop.f32.mrf.mxu0
    %v559 = vadd.f32 0.0, %v558
    %560 = vdwg.mxu0
    %561 = vrot.lane.b32.xlu0 %v145, 64
    %v562 = vpop.permute.xlu0 %561
    %v565 = vsel %vm154, %v453, 0
    %567 = vmatpush.msra.mxu0 0.0
    %568 = vmatpush.msra.mxu0 0.0
    %569 = vmatpush.msra.mxu0 0.0
    %570 = vmatpush.msra.mxu0 0.0
    %571 = vmatpush.msra.mxu0 0.0
    %572 = vmatpush.msra.mxu0 0.0
    %573 = vmatpush.msra.mxu0 0.0
    %574 = vmatpush.msra.mxu0 0.0
    %575 = vmatpush.msra.mxu0 0.0
    %576 = vmatpush.msra.mxu0 0.0
    %577 = vmatpush.msra.mxu0 0.0
    %578 = vmatpush.msra.mxu0 0.0
    %579 = vmatpush.msra.mxu0 0.0
    %580 = vmatpush.msra.mxu0 0.0
    %581 = vmatpush.msra.mxu0 0.0
    %582 = vmatpush.msra.mxu0 %v562
    %583 = vmatmul.f32.gmra.mxu0 %v565
    %v584 = vpop.f32.mrf.mxu0
    %v585 = vadd.f32 0.0, %v584
    %586 = vdwg.mxu0
    %587 = vrot.lane.b32.xlu0 %v147, 64
    %v588 = vpop.permute.xlu0 %587
    %v591 = vsel %vm154, %v454, 0
    %593 = vmatpush.msra.mxu0 0.0
    %594 = vmatpush.msra.mxu0 0.0
    %595 = vmatpush.msra.mxu0 0.0
    %596 = vmatpush.msra.mxu0 0.0
    %597 = vmatpush.msra.mxu0 0.0
    %598 = vmatpush.msra.mxu0 0.0
    %599 = vmatpush.msra.mxu0 0.0
    %600 = vmatpush.msra.mxu0 0.0
    %601 = vmatpush.msra.mxu0 0.0
    %602 = vmatpush.msra.mxu0 0.0
    %603 = vmatpush.msra.mxu0 0.0
    %604 = vmatpush.msra.mxu0 0.0
    %605 = vmatpush.msra.mxu0 0.0
    %606 = vmatpush.msra.mxu0 0.0
    %607 = vmatpush.msra.mxu0 0.0
    %608 = vmatpush.msra.mxu0 %v588
    %609 = vmatmul.f32.gmra.mxu0 %v591
    %v610 = vpop.f32.mrf.mxu0
    %v611 = vadd.f32 0.0, %v610
    %612 = vdwg.mxu0
    %613 = vrot.lane.b32.xlu0 %v149, 64
    %v614 = vpop.permute.xlu0 %613
    %v617 = vsel %vm154, %v455, 0
    %619 = vmatpush.msra.mxu0 0.0
    %620 = vmatpush.msra.mxu0 0.0
    %621 = vmatpush.msra.mxu0 0.0
    %622 = vmatpush.msra.mxu0 0.0
    %623 = vmatpush.msra.mxu0 0.0
    %624 = vmatpush.msra.mxu0 0.0
    %625 = vmatpush.msra.mxu0 0.0
    %626 = vmatpush.msra.mxu0 0.0
    %627 = vmatpush.msra.mxu0 0.0
    %628 = vmatpush.msra.mxu0 0.0
    %629 = vmatpush.msra.mxu0 0.0
    %630 = vmatpush.msra.mxu0 0.0
    %631 = vmatpush.msra.mxu0 0.0
    %632 = vmatpush.msra.mxu0 0.0
    %633 = vmatpush.msra.mxu0 0.0
    %634 = vmatpush.msra.mxu0 %v614
    %635 = vmatmul.f32.gmra.mxu0 %v617
    %v636 = vpop.f32.mrf.mxu0
    %v637 = vadd.f32 0.0, %v636
    %638 = vdwg.mxu0
    %639 = vrot.lane.b32.xlu0 %v151, 64
    %v640 = vpop.permute.xlu0 %639
    %v643 = vsel %vm154, %v456, 0
    %645 = vmatpush.msra.mxu0 0.0
    %646 = vmatpush.msra.mxu0 0.0
    %647 = vmatpush.msra.mxu0 0.0
    %648 = vmatpush.msra.mxu0 0.0
    %649 = vmatpush.msra.mxu0 0.0
    %650 = vmatpush.msra.mxu0 0.0
    %651 = vmatpush.msra.mxu0 0.0
    %652 = vmatpush.msra.mxu0 0.0
    %653 = vmatpush.msra.mxu0 0.0
    %654 = vmatpush.msra.mxu0 0.0
    %655 = vmatpush.msra.mxu0 0.0
    %656 = vmatpush.msra.mxu0 0.0
    %657 = vmatpush.msra.mxu0 0.0
    %658 = vmatpush.msra.mxu0 0.0
    %659 = vmatpush.msra.mxu0 0.0
    %660 = vmatpush.msra.mxu0 %v640
    %661 = vmatmul.f32.gmra.mxu0 %v643
    %v662 = vpop.f32.mrf.mxu0
    %v663 = vadd.f32 0.0, %v662
    %664 = vdwg.mxu0
    %667 = vrot.lane.b32.xlu0 %v533, 8
    %v668 = vpop.permute.xlu0 %667
    %669 = vrot.lane.b32.xlu0 %v559, 8
    %v670 = vpop.permute.xlu0 %669
    %675 = vrot.lane.b32.xlu0 %v585, 16
    %v676 = vpop.permute.xlu0 %675
    %677 = vrot.lane.b32.xlu0 %v611, 16
    %v678 = vpop.permute.xlu0 %677
    %683 = vrot.lane.b32.xlu0 %v637, 24
    %v684 = vpop.permute.xlu0 %683
    %685 = vrot.lane.b32.xlu0 %v663, 24
    %v686 = vpop.permute.xlu0 %685
    %v689 = vsel %vm154, %v481, %v668
    %v690 = vsel %vm154, %v507, %v670
    %vm691 = vcmask 130048
    %v692 = vsel %vm691, %v689, %v676
    %v693 = vsel %vm691, %v690, %v678
    %vm694 = vcmask 195584
    %v695 = vsel %vm694, %v692, %v684
    %v696 = vsel %vm694, %v693, %v686
    %v697 = vld [vmem:[#allocation2 + $0x8] sm:$0xff]
    %v698 = vld [vmem:[#allocation2 + $0x30] sm:$0xff]
    %v699 = vld [vmem:[#allocation2 + $0x58] sm:$0xff]
    %v700 = vld [vmem:[#allocation2 + $0x80] sm:$0xff]
    %v701 = vld [vmem:[#allocation2 + $0x10] sm:$0xff]
    %v702 = vld [vmem:[#allocation2 + $0x38] sm:$0xff]
    %v703 = vld [vmem:[#allocation2 + $0x60] sm:$0xff]
    %v704 = vld [vmem:[#allocation2 + $0x88] sm:$0xff]
    %v706 = vsel %vm46, %v695, 0
    %v709 = vsel %vm46, %v696, 0
    %711 = vmatpush.msra.mxu0 0.0
    %712 = vmatpush.msra.mxu0 0.0
    %713 = vmatpush.msra.mxu0 0.0
    %714 = vmatpush.msra.mxu0 0.0
    %715 = vmatpush.msra.mxu0 0.0
    %716 = vmatpush.msra.mxu0 0.0
    %717 = vmatpush.msra.mxu0 0.0
    %718 = vmatpush.msra.mxu0 0.0
    %719 = vmatpush.msra.mxu0 0.0
    %720 = vmatpush.msra.mxu0 0.0
    %721 = vmatpush.msra.mxu0 0.0
    %722 = vmatpush.msra.mxu0 0.0
    %723 = vmatpush.msra.mxu0 %v700
    %724 = vmatpush.msra.mxu0 %v699
    %725 = vmatpush.msra.mxu0 %v698
    %726 = vmatpush.msra.mxu0 %v697
    %727 = vmatmul.f32.gmra.mxu0 %v706
    %v728 = vpop.f32.mrf.mxu0
    %v729 = vadd.f32 0.0, %v728
    %730 = vmatmul.f32.gmra.mxu0 %v709
    %v731 = vpop.f32.mrf.mxu0
    %v732 = vadd.f32 0.0, %v731
    %733 = vdwg.mxu0
    %v735 = vsel %vm46, %v34, 0
    %v738 = vsel %vm46, %v35, 0
    %740 = vmatpush.msra.mxu0 0.0
    %741 = vmatpush.msra.mxu0 0.0
    %742 = vmatpush.msra.mxu0 0.0
    %743 = vmatpush.msra.mxu0 0.0
    %744 = vmatpush.msra.mxu0 0.0
    %745 = vmatpush.msra.mxu0 0.0
    %746 = vmatpush.msra.mxu0 0.0
    %747 = vmatpush.msra.mxu0 0.0
    %748 = vmatpush.msra.mxu0 0.0
    %749 = vmatpush.msra.mxu0 0.0
    %750 = vmatpush.msra.mxu0 0.0
    %751 = vmatpush.msra.mxu0 0.0
    %752 = vmatpush.msra.mxu0 %v704
    %753 = vmatpush.msra.mxu0 %v703
    %754 = vmatpush.msra.mxu0 %v702
    %755 = vmatpush.msra.mxu0 %v701
    %756 = vmatmul.f32.gmra.mxu0 %v735
    %v757 = vpop.f32.mrf.mxu0
    %v758 = vadd.f32 %v729, %v757
    %759 = vmatmul.f32.gmra.mxu0 %v738
    %v760 = vpop.f32.mrf.mxu0
    %v761 = vadd.f32 %v732, %v760
    %762 = vdwg.mxu0
    %v763 = vperm.slane %v39, 0
    %v764 = vadd.f32 %v758, %v763
    %v765 = vadd.f32 %v761, %v763
    %v766 = vadd.f32 %v34, %v764
    %v767 = vadd.f32 %v35, %v765
    %v768 = vsel %vm46, %v766, 0.0
    %769 = vadd.xlane.f32.xlu0 %v768
    %v770 = vpop.xlane.xlu0 %769
    %v771 = vsel %vm46, %v767, 0.0
    %772 = vadd.xlane.f32.xlu0 %v771
    %v773 = vpop.xlane.xlu0 %772
    %v774 = vmul.f32 %v770, %v59
    %v775 = vmul.f32 %v773, %v59
    %v776 = vsub.f32 %v766, %v774
    %v777 = vsub.f32 %v767, %v775
    %v778 = vmul.f32 %v776, %v776
    %v779 = vmul.f32 %v777, %v777
    %v780 = vsel %vm46, %v778, 0.0
    %781 = vadd.xlane.f32.xlu0 %v780
    %v782 = vpop.xlane.xlu0 %781
    %v783 = vsel %vm46, %v779, 0.0
    %784 = vadd.xlane.f32.xlu0 %v783
    %v785 = vpop.xlane.xlu0 %784
    %v786 = vmul.f32 %v782, %v59
    %v787 = vmul.f32 %v785, %v59
    %v788 = vadd.f32 %v786, 1e-05
    %v789 = vadd.f32 %v787, 1e-05
    %v790 = vrsqrt.pop %v788
    %v791 = vmul.f32 %v790, %v788
    %v792 = vmul.f32 %v791, %v790
    %v793 = vmul.f32 0.5, %v792
    %v794 = vsub.f32 1.5, %v793
    %v795 = vmul.f32 %v790, %v794
    %vm796 = vweird.f32 %v788
    %vm797 = vweird.f32 %v790
    %vm798 = vmor %vm796, %vm797
    %v799 = vsel %vm798, %v790, %v795
    %v800 = vrsqrt.pop %v789
    %v801 = vmul.f32 %v800, %v789
    %v802 = vmul.f32 %v801, %v800
    %v803 = vmul.f32 0.5, %v802
    %v804 = vsub.f32 1.5, %v803
    %v805 = vmul.f32 %v800, %v804
    %vm806 = vweird.f32 %v789
    %vm807 = vweird.f32 %v800
    %vm808 = vmor %vm806, %vm807
    %v809 = vsel %vm808, %v800, %v805
    %v810 = vmul.f32 %v776, %v799
    %v811 = vmul.f32 %v777, %v809
    %v812 = vperm.slane %v40, 0
    %v813 = vmul.f32 %v810, %v812
    %v814 = vmul.f32 %v811, %v812
    %v815 = vperm.slane %v41, 0
    %v816 = vadd.f32 %v813, %v815
    %v817 = vadd.f32 %v814, %v815
    %v818 = vld [vmem:[#allocation2 + $0x18] sm:$0xff]
    %v819 = vld [vmem:[#allocation2 + $0x40] sm:$0xff]
    %v820 = vld [vmem:[#allocation2 + $0x68] sm:$0xff]
    %v821 = vld [vmem:[#allocation2 + $0x90] sm:$0xff]
    %v822 = vperm.slane %v42, 0
    %v824 = vsel %vm46, %v816, 0
    %v827 = vsel %vm46, %v817, 0
    %829 = vmatpush.msra.mxu0 0.0
    %830 = vmatpush.msra.mxu0 0.0
    %831 = vmatpush.msra.mxu0 0.0
    %832 = vmatpush.msra.mxu0 0.0
    %833 = vmatpush.msra.mxu0 0.0
    %834 = vmatpush.msra.mxu0 0.0
    %835 = vmatpush.msra.mxu0 0.0
    %836 = vmatpush.msra.mxu0 0.0
    %837 = vmatpush.msra.mxu0 0.0
    %838 = vmatpush.msra.mxu0 0.0
    %839 = vmatpush.msra.mxu0 0.0
    %840 = vmatpush.msra.mxu0 0.0
    %841 = vmatpush.msra.mxu0 %v821
    %842 = vmatpush.msra.mxu0 %v820
    %843 = vmatpush.msra.mxu0 %v819
    %844 = vmatpush.msra.mxu0 %v818
    %845 = vmatmul.f32.gmra.mxu0 %v824
    %v846 = vpop.f32.mrf.mxu0
    %v847 = vadd.f32 %v822, %v846
    %848 = vmatmul.f32.gmra.mxu0 %v827
    %v849 = vpop.f32.mrf.mxu0
    %v850 = vadd.f32 %v822, %v849
    %851 = vdwg.mxu0
    %v852 = vmax.f32 %v847, 0.0
    %v853 = vmax.f32 %v850, 0.0
    %v854 = vld [vmem:[#allocation2 + $0x20] sm:$0xff]
    %v855 = vld [vmem:[#allocation2 + $0x48] sm:$0xff]
    %v856 = vld [vmem:[#allocation2 + $0x70] sm:$0xff]
    %v857 = vld [vmem:[#allocation2 + $0x98] sm:$0xff]
    %v858 = vld [vmem:[%s2] sm:$0xff]
    %v859 = vld [vmem:[%s2 + $0x8] sm:$0xff]
    %v860 = vld [vmem:[%s2 + $0x10] sm:$0xff]
    %v861 = vld [vmem:[%s2 + $0x18] sm:$0xff]
    %v862 = vld [vmem:[%s2 + $0x20] sm:$0xff]
    %v863 = vld [vmem:[%s2 + $0x28] sm:$0xff]
    %v864 = vld [vmem:[%s2 + $0x30] sm:$0xff]
    %v865 = vld [vmem:[%s2 + $0x38] sm:$0xff]
    %vm866 = vcmask 523264
    %v868 = vsel %vm866, %v852, 0
    %v871 = vsel %vm866, %v853, 0
    %873 = vmatpush.msra.mxu0 0.0
    %874 = vmatpush.msra.mxu0 0.0
    %875 = vmatpush.msra.mxu0 0.0
    %876 = vmatpush.msra.mxu0 0.0
    %877 = vmatpush.msra.mxu0 0.0
    %878 = vmatpush.msra.mxu0 0.0
    %879 = vmatpush.msra.mxu0 0.0
    %880 = vmatpush.msra.mxu0 0.0
    %881 = vmatpush.msra.mxu0 %v865
    %882 = vmatpush.msra.mxu0 %v864
    %883 = vmatpush.msra.mxu0 %v863
    %884 = vmatpush.msra.mxu0 %v862
    %885 = vmatpush.msra.mxu0 %v861
    %886 = vmatpush.msra.mxu0 %v860
    %887 = vmatpush.msra.mxu0 %v859
    %888 = vmatpush.msra.mxu0 %v858
    %889 = vmatmul.f32.gmra.mxu0 %v868
    %v890 = vpop.f32.mrf.mxu0
    %v891 = vadd.f32 0.0, %v890
    %892 = vmatmul.f32.gmra.mxu0 %v871
    %v893 = vpop.f32.mrf.mxu0
    %v894 = vadd.f32 0.0, %v893
    %895 = vdwg.mxu0
    %v897 = vsel %vm46, %v766, 0
    %v900 = vsel %vm46, %v767, 0
    %902 = vmatpush.msra.mxu0 0.0
    %903 = vmatpush.msra.mxu0 0.0
    %904 = vmatpush.msra.mxu0 0.0
    %905 = vmatpush.msra.mxu0 0.0
    %906 = vmatpush.msra.mxu0 0.0
    %907 = vmatpush.msra.mxu0 0.0
    %908 = vmatpush.msra.mxu0 0.0
    %909 = vmatpush.msra.mxu0 0.0
    %910 = vmatpush.msra.mxu0 0.0
    %911 = vmatpush.msra.mxu0 0.0
    %912 = vmatpush.msra.mxu0 0.0
    %913 = vmatpush.msra.mxu0 0.0
    %914 = vmatpush.msra.mxu0 %v857
    %915 = vmatpush.msra.mxu0 %v856
    %916 = vmatpush.msra.mxu0 %v855
    %917 = vmatpush.msra.mxu0 %v854
    %918 = vmatmul.f32.gmra.mxu0 %v897
    %v919 = vpop.f32.mrf.mxu0
    %v920 = vadd.f32 %v891, %v919
    %921 = vmatmul.f32.gmra.mxu0 %v900
    %v922 = vpop.f32.mrf.mxu0
    %v923 = vadd.f32 %v894, %v922
    %924 = vdwg.mxu0
    %v925 = vperm.slane %v43, 0
    %v926 = vadd.f32 %v920, %v925
    %v927 = vadd.f32 %v923, %v925
    %v928 = vadd.f32 %v766, %v926
    %v929 = vadd.f32 %v767, %v927
    %v930 = vsel %vm46, %v928, 0.0
    %931 = vadd.xlane.f32.xlu0 %v930
    %v932 = vpop.xlane.xlu0 %931
    %v933 = vsel %vm46, %v929, 0.0
    %934 = vadd.xlane.f32.xlu0 %v933
    %v935 = vpop.xlane.xlu0 %934
    %v936 = vmul.f32 %v932, %v59
    %v937 = vmul.f32 %v935, %v59
    %v938 = vsub.f32 %v928, %v936
    %v939 = vsub.f32 %v929, %v937
    %v940 = vmul.f32 %v938, %v938
    %v941 = vmul.f32 %v939, %v939
    %v942 = vsel %vm46, %v940, 0.0
    %943 = vadd.xlane.f32.xlu0 %v942
    %v944 = vpop.xlane.xlu0 %943
    %v945 = vsel %vm46, %v941, 0.0
    %946 = vadd.xlane.f32.xlu0 %v945
    %v947 = vpop.xlane.xlu0 %946
    %v948 = vmul.f32 %v944, %v59
    %v949 = vmul.f32 %v947, %v59
    %v950 = vadd.f32 %v948, 1e-05
    %v951 = vadd.f32 %v949, 1e-05
    %v952 = vrsqrt.pop %v950
    %v953 = vmul.f32 %v952, %v950
    %v954 = vmul.f32 %v953, %v952
    %v955 = vmul.f32 0.5, %v954
    %v956 = vsub.f32 1.5, %v955
    %v957 = vmul.f32 %v952, %v956
    %vm958 = vweird.f32 %v950
    %vm959 = vweird.f32 %v952
    %vm960 = vmor %vm958, %vm959
    %v961 = vsel %vm960, %v952, %v957
    %v962 = vrsqrt.pop %v951
    %v963 = vmul.f32 %v962, %v951
    %v964 = vmul.f32 %v963, %v962
    %v965 = vmul.f32 0.5, %v964
    %v966 = vsub.f32 1.5, %v965
    %v967 = vmul.f32 %v962, %v966
    %vm968 = vweird.f32 %v951
    %vm969 = vweird.f32 %v962
    %vm970 = vmor %vm968, %vm969
    %v971 = vsel %vm970, %v962, %v967
    %v972 = vmul.f32 %v938, %v961
    %v973 = vmul.f32 %v939, %v971
    %v974 = vperm.slane %v44, 0
    %v975 = vmul.f32 %v972, %v974
    %v976 = vmul.f32 %v973, %v974
    %v977 = vperm.slane %v45, 0
    %v978 = vadd.f32 %v975, %v977
    %v979 = vadd.f32 %v976, %v977
    %980 = vst.msk [vmem:[#allocation5] sm:$0xff] %vm46, %v978
    %981 = vst.msk [vmem:[#allocation5 + $0x8] sm:$0xff] %vm46, %v979
    // Predicated region
    $region22: #{tpu_custom_call.1} parent=1 // pred_check
      _
    $region23: #{tpu_custom_call.1} parent=1 // pred_check_branch
      %983 = sbr.rel (0) target = $region25
    $region24: #{tpu_custom_call.1} parent=1 // pred_region
      %985 = vsyncadd [#allocation4], 0
      %s986 = sshll.u32 [#allocation5], 4
      %s987 = int_to_ptr.vmem [resolvable:$true] %s986
      %s988 = sshll.u32 %s4, 4
      %s989 = int_to_ptr.hbm [resolvable:$true] %s988
      %994 = dma.vmem_to_hbm [thread:$0]  %s987, 256, %s989, [#allocation4], 128, 128, 8
    $region25: #{tpu_custom_call.1} parent=1 // pred_fallthru
      _
    // Predicated region
    $region26: #{tpu_custom_call.1} parent=1 // pred_check
      _
    $region27: #{tpu_custom_call.1} parent=1 // pred_check_branch
      %996 = sbr.rel (0) target = $region29
    $region28: #{tpu_custom_call.1} parent=1 // pred_region
      %998 = dma.done [#allocation4], 256
    $region29: #{tpu_custom_call.1} parent=1 // pred_fallthru
      _
    %999 = vsyncpa [#allocation3], 1
    %1000 = vsyncpa [#allocation4], 1

</llo_original>
